<compile_context>
chip_gen: v7x
topology: tpu7x:2x2x1
jax: 0.10.0
libtpu: 0.0.40
codegen_flags: <defaults>
</compile_context>

<pallas_src>
import functools

import jax
import jax.numpy as jnp
from jax.experimental import pallas as pl
from jax.experimental.pallas import tpu as pltpu


# ----------------------------------------------------------------------------
# Fused Pallas kernel: dil -> softmax -> BN1 -> ers -> softmax -> BN2 -> ReLU
# ----------------------------------------------------------------------------
def _closing_kernel(x_ref, w_ref, bn_ref, out_ref, *, K, W, eps):
    """
    x_ref  : (B, C, L)        flattened activations, L = H*W (lane-dense)
    w_ref  : (2*K*K, C, 1)    morphology weights, dilation taps then erosion taps
    bn_ref : (4, C, 1)        [gamma1, beta1, gamma2, beta2]
    out_ref: (B, C, L)
    """
    B, C, L = x_ref.shape
    KK = K * K
    p = K // 2
    pad = p * W + p  # flat zero halo wide enough for every (di, dj) offset

    # ---- hoisted once, shared by both morphology stages ---------------------
    # Column index of every flattened pixel, generated in-kernel (no extra DMA).
    l_idx = jax.lax.broadcasted_iota(jnp.int32, (1, 1, L), 2)
    col = (l_idx & (W - 1)) if (W & (W - 1)) == 0 else (l_idx % W)
    # Column-validity masks; only dj != 0 taps need one, identical for both stages.
    colmask = {}
    for dj in range(-p, p + 1):
        if dj == 0:
            colmask[dj] = None
        elif dj < 0:
            colmask[dj] = col >= -dj          # col + dj >= 0
        else:
            colmask[dj] = col < (W - dj)      # col + dj <  W

    # One lane-broadcast of ALL tap weights (JAX does not CSE broadcast_in_dim,
    # so doing this per tap would emit 18 separate broadcasts).
    wb = jnp.broadcast_to(w_ref[...], (2 * KK, C, L))           # (2*K*K, C, L)
    bn = bn_ref[...]                                            # (4, C, 1)

    zhalo = jnp.zeros((B, C, pad), jnp.float32)

    def morph_softmax(v, w_off, dilate):
        # Zero-pad this stage's input in registers (== nn.Unfold zero padding).
        # Row over/underflow of a tap lands in the zero halo; column overflow
        # (which would wrap into the adjacent row) is masked to 0.
        xp = jnp.concatenate([zhalo, v, zhalo], axis=2)         # (B, C, L+2*pad)
        acc = None
        j = 0
        for di in range(-p, p + 1):
            for dj in range(-p, p + 1):
                start = pad + di * W + dj
                win = xp[:, :, start:start + L]                 # static slice (B,C,L)
                m = colmask[dj]
                if m is not None:
                    win = jnp.where(m, win, 0.0)
                wj = wb[w_off + j]                              # (C, L) static slice
                t = win + wj if dilate else win - wj
                if acc is None:
                    acc = t
                elif dilate:
                    acc = jnp.maximum(acc, t)
                else:
                    acc = jnp.minimum(acc, t)
                j += 1
        # Softmax over channels (Softmax(dim=-1) on the PyTorch (B, L, C) view).
        mx = jnp.max(acc, axis=1, keepdims=True)
        e = jnp.exp(acc - mx)
        inv = 1.0 / jnp.sum(e, axis=1, keepdims=True)           # (B,1,L): C× fewer divides
        return e * inv

    def batchnorm(v, g, b):
        # Training-mode BatchNorm2d: biased batch statistics over (B, H, W),
        # computed in-kernel and folded into a single scale/shift.
        inv_n = 1.0 / (B * L)
        mean = jnp.sum(jnp.sum(v, axis=2, keepdims=True),
                       axis=0, keepdims=True) * inv_n           # (1, C, 1)
        d = v - mean
        var = jnp.sum(jnp.sum(d * d, axis=2, keepdims=True),
                      axis=0, keepdims=True) * inv_n            # (1, C, 1)
        scale = g[None] * jax.lax.rsqrt(var + eps)              # (1, C, 1)
        shift = b[None] - mean * scale
        return v * scale + shift

    y1 = morph_softmax(x_ref[...].astype(jnp.float32), 0, True)   # self.dil(x)
    z1 = batchnorm(y1, bn[0], bn[1])                               # self.bn1
    y2 = morph_softmax(z1, KK, False)                              # self.ers
    z2 = batchnorm(y2, bn[2], bn[3])                               # self.bn2
    out_ref[...] = jnp.maximum(z2, 0.0).astype(out_ref.dtype)      # ReLU, lane-dense store


# ----------------------------------------------------------------------------
# Wrapper: tiny layout/parameter packing only (3 inputs, no pre-broadcasts)
# ----------------------------------------------------------------------------
def closing_forward(x, w_dil, w_ers, gamma1, beta1, gamma2, beta2, eps=1e-5):
    """x: (B, C, H, W) f32; w_*: (C, K, K); gamma*/beta*: (C,)."""
    B, C, H, W = x.shape
    K = w_dil.shape[-1]
    KK = K * K
    L = H * W

    xf = x.reshape(B, C, L)                                       # free reshape
    # tap-major weights: w[c, ki, kj] -> (K*K, C); tap = ki*K + kj; pack both ops.
    wd = jnp.transpose(w_dil.reshape(C, KK), (1, 0))
    we = jnp.transpose(w_ers.reshape(C, KK), (1, 0))
    w_packed = jnp.concatenate([wd, we], axis=0)[:, :, None]      # (2*K*K, C, 1)
    bn_packed = jnp.stack([gamma1, beta1, gamma2, beta2],
                          axis=0)[:, :, None]                     # (4, C, 1)

    kernel = functools.partial(_closing_kernel, K=K, W=W, eps=eps)
    out_flat = pl.pallas_call(
        kernel,
        out_shape=jax.ShapeDtypeStruct((B, C, L), x.dtype),
        grid=(1,),
        in_specs=[
            pl.BlockSpec((B, C, L), lambda i: (0, 0, 0)),
            pl.BlockSpec((2 * KK, C, 1), lambda i: (0, 0, 0)),
            pl.BlockSpec((4, C, 1), lambda i: (0, 0, 0)),
        ],
        out_specs=pl.BlockSpec((B, C, L), lambda i: (0, 0, 0)),
        compiler_params=pltpu.CompilerParams(
            dimension_semantics=("arbitrary",)),
    )(xf, w_packed, bn_packed)
    return out_flat.reshape(B, C, H, W)


# ----------------------------------------------------------------------------
# Pure-JAX reference (mirrors the PyTorch semantics) for verification
# ----------------------------------------------------------------------------
def _morph_ref(x, w, op):
    B, C, H, W = x.shape
    K = w.shape[-1]
    p = K // 2
    xp = jnp.pad(x, ((0, 0), (0, 0), (p, p), (p, p)))
    cols = [xp[:, :, ki:ki + H, kj:kj + W] for ki in range(K) for kj in range(K)]
    patches = jnp.stack(cols, axis=-1)                       # (B,C,H,W,K*K)
    wv = w.reshape(C, K * K)[None, :, None, None, :]
    if op == "dilation":
        r = jnp.max(patches + wv, axis=-1)
    else:
        r = jnp.min(patches - wv, axis=-1)
    return jax.nn.softmax(r, axis=1)


def _bn_ref(x, gamma, beta, eps=1e-5):
    m = jnp.mean(x, axis=(0, 2, 3), keepdims=True)
    v = jnp.var(x, axis=(0, 2, 3), keepdims=True)
    return (x - m) / jnp.sqrt(v + eps) * gamma[None, :, None, None] \
        + beta[None, :, None, None]


def closing_ref(x, w_dil, w_ers, gamma1, beta1, gamma2, beta2):
    y = _bn_ref(_morph_ref(x, w_dil, "dilation"), gamma1, beta1)
    y = _bn_ref(_morph_ref(y, w_ers, "erosion"), gamma2, beta2)
    return jnp.maximum(y, 0.0)


# ----------------------------------------------------------------------------
if __name__ == "__main__":
    B, C, H, W, K = 2, 4, 16, 16, 3

    key = jax.random.PRNGKey(0)
    k_x, k_wd, k_we, k_g1, k_b1, k_g2, k_b2 = jax.random.split(key, 7)

    x = jax.random.normal(k_x, (B, C, H, W), dtype=jnp.float32)
    # PyTorch init is zeros; use small deterministic values so the op is non-trivial.
    w_dil = 0.1 * jax.random.normal(k_wd, (C, K, K), dtype=jnp.float32)
    w_ers = 0.1 * jax.random.normal(k_we, (C, K, K), dtype=jnp.float32)
    gamma1 = 1.0 + 0.1 * jax.random.normal(k_g1, (C,), dtype=jnp.float32)
    beta1 = 0.1 * jax.random.normal(k_b1, (C,), dtype=jnp.float32)
    gamma2 = 1.0 + 0.1 * jax.random.normal(k_g2, (C,), dtype=jnp.float32)
    beta2 = 0.1 * jax.random.normal(k_b2, (C,), dtype=jnp.float32)

    out = jax.jit(closing_forward)(x, w_dil, w_ers, gamma1, beta1, gamma2, beta2)
    out = jax.block_until_ready(out)

    ref = jax.block_until_ready(
        closing_ref(x, w_dil, w_ers, gamma1, beta1, gamma2, beta2)
    )

    if not bool(jnp.allclose(out, ref, atol=1e-4, rtol=1e-4)):
        raise AssertionError(
            f"mismatch: max abs err = {float(jnp.max(jnp.abs(out - ref)))}"
        )
    print("KERNEL_OK")
</pallas_src>

<mosaic_0001>
module attributes {stable_mosaic.version = 11 : i64} {
  func.func @_closing_kernel(%arg0: i32, %arg1: memref<2x4x256xf32, #tpu.memory_space<vmem>>, %arg2: memref<18x4x1xf32, #tpu.memory_space<vmem>>, %arg3: memref<4x4x1xf32, #tpu.memory_space<vmem>>, %arg4: memref<2x4x256xf32, #tpu.memory_space<vmem>>) attributes {dimension_semantics = [#tpu.dimension_semantics<arbitrary>], iteration_bounds = array<i64: 1>, scalar_prefetch = 0 : i64, scratch_operands = 0 : i64, tpu.core_type = #tpu.core_type<tc>, window_params = [{pipeline_mode = #tpu.pipeline_mode<synchronous>, transform_indices = @transform_0, window_bounds = array<i64: 2, 4, 256>}, {pipeline_mode = #tpu.pipeline_mode<synchronous>, transform_indices = @transform_1, window_bounds = array<i64: 18, 4, 1>}, {pipeline_mode = #tpu.pipeline_mode<synchronous>, transform_indices = @transform_2, window_bounds = array<i64: 4, 4, 1>}, {pipeline_mode = #tpu.pipeline_mode<synchronous>, transform_indices = @transform_3, window_bounds = array<i64: 2, 4, 256>}]} {
    %0 = tpu.iota {dimensions = array<i32: 2>} : vector<1x1x256xi32>
    %c15_i32 = arith.constant 15 : i32
    %1 = vector.broadcast %c15_i32 : i32 to vector<1x1x256xi32>
    %2 = arith.andi %0, %1 : vector<1x1x256xi32>
    %c1_i32 = arith.constant 1 : i32
    %3 = vector.broadcast %c1_i32 : i32 to vector<1x1x256xi32>
    %4 = arith.cmpi sge, %2, %3 : vector<1x1x256xi32>
    %c15_i32_0 = arith.constant 15 : i32
    %5 = vector.broadcast %c15_i32_0 : i32 to vector<1x1x256xi32>
    %6 = arith.cmpi slt, %2, %5 : vector<1x1x256xi32>
    %c0 = arith.constant 0 : index
    %c0_1 = arith.constant 0 : index
    %c0_2 = arith.constant 0 : index
    %7 = vector.load %arg2[%c0, %c0_1, %c0_2] : memref<18x4x1xf32, #tpu.memory_space<vmem>>, vector<18x4x1xf32>
    %8 = vector.shape_cast %7 : vector<18x4x1xf32> to vector<18x4x1xf32>
    %9 = vector.broadcast %8 : vector<18x4x1xf32> to vector<18x4x256xf32>
    %c0_3 = arith.constant 0 : index
    %c0_4 = arith.constant 0 : index
    %c0_5 = arith.constant 0 : index
    %10 = vector.load %arg3[%c0_3, %c0_4, %c0_5] : memref<4x4x1xf32, #tpu.memory_space<vmem>>, vector<4x4x1xf32>
    %cst = arith.constant 0.000000e+00 : f32
    %11 = vector.broadcast %cst : f32 to vector<2x4x17xf32>
    %c0_6 = arith.constant 0 : index
    %c0_7 = arith.constant 0 : index
    %c0_8 = arith.constant 0 : index
    %12 = vector.load %arg1[%c0_6, %c0_7, %c0_8] : memref<2x4x256xf32, #tpu.memory_space<vmem>>, vector<2x4x256xf32>
    %13 = tpu.concatenate %11, %12, %11 in 2 : vector<2x4x17xf32>, vector<2x4x256xf32>, vector<2x4x17xf32> -> vector<2x4x290xf32>
    %14 = vector.extract_strided_slice %13 {offsets = [0, 0, 0], sizes = [2, 4, 256], strides = [1, 1, 1]} : vector<2x4x290xf32> to vector<2x4x256xf32>
    %cst_9 = arith.constant 0.000000e+00 : f32
    %15 = vector.shape_cast %4 : vector<1x1x256xi1> to vector<1x1x256xi1>
    %16 = vector.broadcast %15 : vector<1x1x256xi1> to vector<2x4x256xi1>
    %17 = vector.broadcast %cst_9 : f32 to vector<2x4x256xf32>
    %18 = arith.select %16, %14, %17 : vector<2x4x256xi1>, vector<2x4x256xf32>
    %19 = vector.extract_strided_slice %9 {offsets = [0, 0, 0], sizes = [1, 4, 256], strides = [1, 1, 1]} : vector<18x4x256xf32> to vector<1x4x256xf32>
    %20 = vector.shape_cast %19 : vector<1x4x256xf32> to vector<4x256xf32>
    %21 = vector.shape_cast %20 : vector<4x256xf32> to vector<1x4x256xf32>
    %22 = vector.broadcast %21 : vector<1x4x256xf32> to vector<2x4x256xf32>
    %23 = arith.addf %18, %22 : vector<2x4x256xf32>
    %24 = vector.extract_strided_slice %13 {offsets = [0, 0, 1], sizes = [2, 4, 256], strides = [1, 1, 1]} : vector<2x4x290xf32> to vector<2x4x256xf32>
    %25 = vector.extract_strided_slice %9 {offsets = [1, 0, 0], sizes = [1, 4, 256], strides = [1, 1, 1]} : vector<18x4x256xf32> to vector<1x4x256xf32>
    %26 = vector.shape_cast %25 : vector<1x4x256xf32> to vector<4x256xf32>
    %27 = vector.shape_cast %26 : vector<4x256xf32> to vector<1x4x256xf32>
    %28 = vector.broadcast %27 : vector<1x4x256xf32> to vector<2x4x256xf32>
    %29 = arith.addf %24, %28 : vector<2x4x256xf32>
    %30 = arith.maximumf %23, %29 : vector<2x4x256xf32>
    %31 = vector.extract_strided_slice %13 {offsets = [0, 0, 2], sizes = [2, 4, 256], strides = [1, 1, 1]} : vector<2x4x290xf32> to vector<2x4x256xf32>
    %cst_10 = arith.constant 0.000000e+00 : f32
    %32 = vector.shape_cast %6 : vector<1x1x256xi1> to vector<1x1x256xi1>
    %33 = vector.broadcast %32 : vector<1x1x256xi1> to vector<2x4x256xi1>
    %34 = vector.broadcast %cst_10 : f32 to vector<2x4x256xf32>
    %35 = arith.select %33, %31, %34 : vector<2x4x256xi1>, vector<2x4x256xf32>
    %36 = vector.extract_strided_slice %9 {offsets = [2, 0, 0], sizes = [1, 4, 256], strides = [1, 1, 1]} : vector<18x4x256xf32> to vector<1x4x256xf32>
    %37 = vector.shape_cast %36 : vector<1x4x256xf32> to vector<4x256xf32>
    %38 = vector.shape_cast %37 : vector<4x256xf32> to vector<1x4x256xf32>
    %39 = vector.broadcast %38 : vector<1x4x256xf32> to vector<2x4x256xf32>
    %40 = arith.addf %35, %39 : vector<2x4x256xf32>
    %41 = arith.maximumf %30, %40 : vector<2x4x256xf32>
    %42 = vector.extract_strided_slice %13 {offsets = [0, 0, 16], sizes = [2, 4, 256], strides = [1, 1, 1]} : vector<2x4x290xf32> to vector<2x4x256xf32>
    %cst_11 = arith.constant 0.000000e+00 : f32
    %43 = vector.shape_cast %4 : vector<1x1x256xi1> to vector<1x1x256xi1>
    %44 = vector.broadcast %43 : vector<1x1x256xi1> to vector<2x4x256xi1>
    %45 = vector.broadcast %cst_11 : f32 to vector<2x4x256xf32>
    %46 = arith.select %44, %42, %45 : vector<2x4x256xi1>, vector<2x4x256xf32>
    %47 = vector.extract_strided_slice %9 {offsets = [3, 0, 0], sizes = [1, 4, 256], strides = [1, 1, 1]} : vector<18x4x256xf32> to vector<1x4x256xf32>
    %48 = vector.shape_cast %47 : vector<1x4x256xf32> to vector<4x256xf32>
    %49 = vector.shape_cast %48 : vector<4x256xf32> to vector<1x4x256xf32>
    %50 = vector.broadcast %49 : vector<1x4x256xf32> to vector<2x4x256xf32>
    %51 = arith.addf %46, %50 : vector<2x4x256xf32>
    %52 = arith.maximumf %41, %51 : vector<2x4x256xf32>
    %53 = vector.extract_strided_slice %13 {offsets = [0, 0, 17], sizes = [2, 4, 256], strides = [1, 1, 1]} : vector<2x4x290xf32> to vector<2x4x256xf32>
    %54 = vector.extract_strided_slice %9 {offsets = [4, 0, 0], sizes = [1, 4, 256], strides = [1, 1, 1]} : vector<18x4x256xf32> to vector<1x4x256xf32>
    %55 = vector.shape_cast %54 : vector<1x4x256xf32> to vector<4x256xf32>
    %56 = vector.shape_cast %55 : vector<4x256xf32> to vector<1x4x256xf32>
    %57 = vector.broadcast %56 : vector<1x4x256xf32> to vector<2x4x256xf32>
    %58 = arith.addf %53, %57 : vector<2x4x256xf32>
    %59 = arith.maximumf %52, %58 : vector<2x4x256xf32>
    %60 = vector.extract_strided_slice %13 {offsets = [0, 0, 18], sizes = [2, 4, 256], strides = [1, 1, 1]} : vector<2x4x290xf32> to vector<2x4x256xf32>
    %cst_12 = arith.constant 0.000000e+00 : f32
    %61 = vector.shape_cast %6 : vector<1x1x256xi1> to vector<1x1x256xi1>
    %62 = vector.broadcast %61 : vector<1x1x256xi1> to vector<2x4x256xi1>
    %63 = vector.broadcast %cst_12 : f32 to vector<2x4x256xf32>
    %64 = arith.select %62, %60, %63 : vector<2x4x256xi1>, vector<2x4x256xf32>
    %65 = vector.extract_strided_slice %9 {offsets = [5, 0, 0], sizes = [1, 4, 256], strides = [1, 1, 1]} : vector<18x4x256xf32> to vector<1x4x256xf32>
    %66 = vector.shape_cast %65 : vector<1x4x256xf32> to vector<4x256xf32>
    %67 = vector.shape_cast %66 : vector<4x256xf32> to vector<1x4x256xf32>
    %68 = vector.broadcast %67 : vector<1x4x256xf32> to vector<2x4x256xf32>
    %69 = arith.addf %64, %68 : vector<2x4x256xf32>
    %70 = arith.maximumf %59, %69 : vector<2x4x256xf32>
    %71 = vector.extract_strided_slice %13 {offsets = [0, 0, 32], sizes = [2, 4, 256], strides = [1, 1, 1]} : vector<2x4x290xf32> to vector<2x4x256xf32>
    %cst_13 = arith.constant 0.000000e+00 : f32
    %72 = vector.shape_cast %4 : vector<1x1x256xi1> to vector<1x1x256xi1>
    %73 = vector.broadcast %72 : vector<1x1x256xi1> to vector<2x4x256xi1>
    %74 = vector.broadcast %cst_13 : f32 to vector<2x4x256xf32>
    %75 = arith.select %73, %71, %74 : vector<2x4x256xi1>, vector<2x4x256xf32>
    %76 = vector.extract_strided_slice %9 {offsets = [6, 0, 0], sizes = [1, 4, 256], strides = [1, 1, 1]} : vector<18x4x256xf32> to vector<1x4x256xf32>
    %77 = vector.shape_cast %76 : vector<1x4x256xf32> to vector<4x256xf32>
    %78 = vector.shape_cast %77 : vector<4x256xf32> to vector<1x4x256xf32>
    %79 = vector.broadcast %78 : vector<1x4x256xf32> to vector<2x4x256xf32>
    %80 = arith.addf %75, %79 : vector<2x4x256xf32>
    %81 = arith.maximumf %70, %80 : vector<2x4x256xf32>
    %82 = vector.extract_strided_slice %13 {offsets = [0, 0, 33], sizes = [2, 4, 256], strides = [1, 1, 1]} : vector<2x4x290xf32> to vector<2x4x256xf32>
    %83 = vector.extract_strided_slice %9 {offsets = [7, 0, 0], sizes = [1, 4, 256], strides = [1, 1, 1]} : vector<18x4x256xf32> to vector<1x4x256xf32>
    %84 = vector.shape_cast %83 : vector<1x4x256xf32> to vector<4x256xf32>
    %85 = vector.shape_cast %84 : vector<4x256xf32> to vector<1x4x256xf32>
    %86 = vector.broadcast %85 : vector<1x4x256xf32> to vector<2x4x256xf32>
    %87 = arith.addf %82, %86 : vector<2x4x256xf32>
    %88 = arith.maximumf %81, %87 : vector<2x4x256xf32>
    %89 = vector.extract_strided_slice %13 {offsets = [0, 0, 34], sizes = [2, 4, 256], strides = [1, 1, 1]} : vector<2x4x290xf32> to vector<2x4x256xf32>
    %cst_14 = arith.constant 0.000000e+00 : f32
    %90 = vector.shape_cast %6 : vector<1x1x256xi1> to vector<1x1x256xi1>
    %91 = vector.broadcast %90 : vector<1x1x256xi1> to vector<2x4x256xi1>
    %92 = vector.broadcast %cst_14 : f32 to vector<2x4x256xf32>
    %93 = arith.select %91, %89, %92 : vector<2x4x256xi1>, vector<2x4x256xf32>
    %94 = vector.extract_strided_slice %9 {offsets = [8, 0, 0], sizes = [1, 4, 256], strides = [1, 1, 1]} : vector<18x4x256xf32> to vector<1x4x256xf32>
    %95 = vector.shape_cast %94 : vector<1x4x256xf32> to vector<4x256xf32>
    %96 = vector.shape_cast %95 : vector<4x256xf32> to vector<1x4x256xf32>
    %97 = vector.broadcast %96 : vector<1x4x256xf32> to vector<2x4x256xf32>
    %98 = arith.addf %93, %97 : vector<2x4x256xf32>
    %99 = arith.maximumf %88, %98 : vector<2x4x256xf32>
    %cst_15 = arith.constant dense<0xFF800000> : vector<2x256xf32>
    %100 = vector.multi_reduction <maximumf>, %99, %cst_15 [1] : vector<2x4x256xf32> to vector<2x256xf32>
    %101 = vector.shape_cast %100 : vector<2x256xf32> to vector<2x1x256xf32>
    %102 = vector.broadcast %101 : vector<2x1x256xf32> to vector<2x4x256xf32>
    %103 = arith.subf %99, %102 : vector<2x4x256xf32>
    %104 = math.exp %103 : vector<2x4x256xf32>
    %cst_16 = arith.constant dense<0.000000e+00> : vector<2x256xf32>
    %105 = vector.multi_reduction <add>, %104, %cst_16 [1] : vector<2x4x256xf32> to vector<2x256xf32>
    %106 = vector.shape_cast %105 : vector<2x256xf32> to vector<2x1x256xf32>
    %cst_17 = arith.constant 1.000000e+00 : f32
    %107 = vector.broadcast %cst_17 : f32 to vector<2x1x256xf32>
    %108 = arith.divf %107, %106 : vector<2x1x256xf32>
    %109 = vector.broadcast %108 : vector<2x1x256xf32> to vector<2x4x256xf32>
    %110 = arith.mulf %104, %109 : vector<2x4x256xf32>
    %111 = vector.extract_strided_slice %10 {offsets = [0, 0, 0], sizes = [1, 4, 1], strides = [1, 1, 1]} : vector<4x4x1xf32> to vector<1x4x1xf32>
    %112 = vector.shape_cast %111 : vector<1x4x1xf32> to vector<4x1xf32>
    %113 = vector.extract_strided_slice %10 {offsets = [1, 0, 0], sizes = [1, 4, 1], strides = [1, 1, 1]} : vector<4x4x1xf32> to vector<1x4x1xf32>
    %114 = vector.shape_cast %113 : vector<1x4x1xf32> to vector<4x1xf32>
    %cst_18 = arith.constant dense<0.000000e+00> : vector<2x4xf32>
    %115 = vector.multi_reduction <add>, %110, %cst_18 [2] : vector<2x4x256xf32> to vector<2x4xf32>
    %116 = vector.shape_cast %115 : vector<2x4xf32> to vector<2x4x1xf32>
    %cst_19 = arith.constant dense<0.000000e+00> : vector<4x1xf32>
    %117 = vector.multi_reduction <add>, %116, %cst_19 [0] : vector<2x4x1xf32> to vector<4x1xf32>
    %118 = vector.shape_cast %117 : vector<4x1xf32> to vector<1x4x1xf32>
    %cst_20 = arith.constant 0.001953125 : f32
    %119 = vector.broadcast %cst_20 : f32 to vector<1x4x1xf32>
    %120 = arith.mulf %118, %119 : vector<1x4x1xf32>
    %121 = vector.broadcast %120 : vector<1x4x1xf32> to vector<2x4x256xf32>
    %122 = arith.subf %110, %121 : vector<2x4x256xf32>
    %123 = arith.mulf %122, %122 : vector<2x4x256xf32>
    %cst_21 = arith.constant dense<0.000000e+00> : vector<2x4xf32>
    %124 = vector.multi_reduction <add>, %123, %cst_21 [2] : vector<2x4x256xf32> to vector<2x4xf32>
    %125 = vector.shape_cast %124 : vector<2x4xf32> to vector<2x4x1xf32>
    %cst_22 = arith.constant dense<0.000000e+00> : vector<4x1xf32>
    %126 = vector.multi_reduction <add>, %125, %cst_22 [0] : vector<2x4x1xf32> to vector<4x1xf32>
    %127 = vector.shape_cast %126 : vector<4x1xf32> to vector<1x4x1xf32>
    %cst_23 = arith.constant 0.001953125 : f32
    %128 = vector.broadcast %cst_23 : f32 to vector<1x4x1xf32>
    %129 = arith.mulf %127, %128 : vector<1x4x1xf32>
    %130 = vector.shape_cast %112 : vector<4x1xf32> to vector<1x4x1xf32>
    %cst_24 = arith.constant 9.99999974E-6 : f32
    %131 = vector.broadcast %cst_24 : f32 to vector<1x4x1xf32>
    %132 = arith.addf %129, %131 : vector<1x4x1xf32>
    %133 = math.rsqrt %132 : vector<1x4x1xf32>
    %134 = arith.mulf %130, %133 : vector<1x4x1xf32>
    %135 = vector.shape_cast %114 : vector<4x1xf32> to vector<1x4x1xf32>
    %136 = arith.mulf %120, %134 : vector<1x4x1xf32>
    %137 = arith.subf %135, %136 : vector<1x4x1xf32>
    %138 = vector.broadcast %134 : vector<1x4x1xf32> to vector<2x4x256xf32>
    %139 = arith.mulf %110, %138 : vector<2x4x256xf32>
    %140 = vector.broadcast %137 : vector<1x4x1xf32> to vector<2x4x256xf32>
    %141 = arith.addf %139, %140 : vector<2x4x256xf32>
    %142 = tpu.concatenate %11, %141, %11 in 2 : vector<2x4x17xf32>, vector<2x4x256xf32>, vector<2x4x17xf32> -> vector<2x4x290xf32>
    %143 = vector.extract_strided_slice %142 {offsets = [0, 0, 0], sizes = [2, 4, 256], strides = [1, 1, 1]} : vector<2x4x290xf32> to vector<2x4x256xf32>
    %cst_25 = arith.constant 0.000000e+00 : f32
    %144 = vector.shape_cast %4 : vector<1x1x256xi1> to vector<1x1x256xi1>
    %145 = vector.broadcast %144 : vector<1x1x256xi1> to vector<2x4x256xi1>
    %146 = vector.broadcast %cst_25 : f32 to vector<2x4x256xf32>
    %147 = arith.select %145, %143, %146 : vector<2x4x256xi1>, vector<2x4x256xf32>
    %148 = vector.extract_strided_slice %9 {offsets = [9, 0, 0], sizes = [1, 4, 256], strides = [1, 1, 1]} : vector<18x4x256xf32> to vector<1x4x256xf32>
    %149 = vector.shape_cast %148 : vector<1x4x256xf32> to vector<4x256xf32>
    %150 = vector.shape_cast %149 : vector<4x256xf32> to vector<1x4x256xf32>
    %151 = vector.broadcast %150 : vector<1x4x256xf32> to vector<2x4x256xf32>
    %152 = arith.subf %147, %151 : vector<2x4x256xf32>
    %153 = vector.extract_strided_slice %142 {offsets = [0, 0, 1], sizes = [2, 4, 256], strides = [1, 1, 1]} : vector<2x4x290xf32> to vector<2x4x256xf32>
    %154 = vector.extract_strided_slice %9 {offsets = [10, 0, 0], sizes = [1, 4, 256], strides = [1, 1, 1]} : vector<18x4x256xf32> to vector<1x4x256xf32>
    %155 = vector.shape_cast %154 : vector<1x4x256xf32> to vector<4x256xf32>
    %156 = vector.shape_cast %155 : vector<4x256xf32> to vector<1x4x256xf32>
    %157 = vector.broadcast %156 : vector<1x4x256xf32> to vector<2x4x256xf32>
    %158 = arith.subf %153, %157 : vector<2x4x256xf32>
    %159 = arith.minimumf %152, %158 : vector<2x4x256xf32>
    %160 = vector.extract_strided_slice %142 {offsets = [0, 0, 2], sizes = [2, 4, 256], strides = [1, 1, 1]} : vector<2x4x290xf32> to vector<2x4x256xf32>
    %cst_26 = arith.constant 0.000000e+00 : f32
    %161 = vector.shape_cast %6 : vector<1x1x256xi1> to vector<1x1x256xi1>
    %162 = vector.broadcast %161 : vector<1x1x256xi1> to vector<2x4x256xi1>
    %163 = vector.broadcast %cst_26 : f32 to vector<2x4x256xf32>
    %164 = arith.select %162, %160, %163 : vector<2x4x256xi1>, vector<2x4x256xf32>
    %165 = vector.extract_strided_slice %9 {offsets = [11, 0, 0], sizes = [1, 4, 256], strides = [1, 1, 1]} : vector<18x4x256xf32> to vector<1x4x256xf32>
    %166 = vector.shape_cast %165 : vector<1x4x256xf32> to vector<4x256xf32>
    %167 = vector.shape_cast %166 : vector<4x256xf32> to vector<1x4x256xf32>
    %168 = vector.broadcast %167 : vector<1x4x256xf32> to vector<2x4x256xf32>
    %169 = arith.subf %164, %168 : vector<2x4x256xf32>
    %170 = arith.minimumf %159, %169 : vector<2x4x256xf32>
    %171 = vector.extract_strided_slice %142 {offsets = [0, 0, 16], sizes = [2, 4, 256], strides = [1, 1, 1]} : vector<2x4x290xf32> to vector<2x4x256xf32>
    %cst_27 = arith.constant 0.000000e+00 : f32
    %172 = vector.shape_cast %4 : vector<1x1x256xi1> to vector<1x1x256xi1>
    %173 = vector.broadcast %172 : vector<1x1x256xi1> to vector<2x4x256xi1>
    %174 = vector.broadcast %cst_27 : f32 to vector<2x4x256xf32>
    %175 = arith.select %173, %171, %174 : vector<2x4x256xi1>, vector<2x4x256xf32>
    %176 = vector.extract_strided_slice %9 {offsets = [12, 0, 0], sizes = [1, 4, 256], strides = [1, 1, 1]} : vector<18x4x256xf32> to vector<1x4x256xf32>
    %177 = vector.shape_cast %176 : vector<1x4x256xf32> to vector<4x256xf32>
    %178 = vector.shape_cast %177 : vector<4x256xf32> to vector<1x4x256xf32>
    %179 = vector.broadcast %178 : vector<1x4x256xf32> to vector<2x4x256xf32>
    %180 = arith.subf %175, %179 : vector<2x4x256xf32>
    %181 = arith.minimumf %170, %180 : vector<2x4x256xf32>
    %182 = vector.extract_strided_slice %142 {offsets = [0, 0, 17], sizes = [2, 4, 256], strides = [1, 1, 1]} : vector<2x4x290xf32> to vector<2x4x256xf32>
    %183 = vector.extract_strided_slice %9 {offsets = [13, 0, 0], sizes = [1, 4, 256], strides = [1, 1, 1]} : vector<18x4x256xf32> to vector<1x4x256xf32>
    %184 = vector.shape_cast %183 : vector<1x4x256xf32> to vector<4x256xf32>
    %185 = vector.shape_cast %184 : vector<4x256xf32> to vector<1x4x256xf32>
    %186 = vector.broadcast %185 : vector<1x4x256xf32> to vector<2x4x256xf32>
    %187 = arith.subf %182, %186 : vector<2x4x256xf32>
    %188 = arith.minimumf %181, %187 : vector<2x4x256xf32>
    %189 = vector.extract_strided_slice %142 {offsets = [0, 0, 18], sizes = [2, 4, 256], strides = [1, 1, 1]} : vector<2x4x290xf32> to vector<2x4x256xf32>
    %cst_28 = arith.constant 0.000000e+00 : f32
    %190 = vector.shape_cast %6 : vector<1x1x256xi1> to vector<1x1x256xi1>
    %191 = vector.broadcast %190 : vector<1x1x256xi1> to vector<2x4x256xi1>
    %192 = vector.broadcast %cst_28 : f32 to vector<2x4x256xf32>
    %193 = arith.select %191, %189, %192 : vector<2x4x256xi1>, vector<2x4x256xf32>
    %194 = vector.extract_strided_slice %9 {offsets = [14, 0, 0], sizes = [1, 4, 256], strides = [1, 1, 1]} : vector<18x4x256xf32> to vector<1x4x256xf32>
    %195 = vector.shape_cast %194 : vector<1x4x256xf32> to vector<4x256xf32>
    %196 = vector.shape_cast %195 : vector<4x256xf32> to vector<1x4x256xf32>
    %197 = vector.broadcast %196 : vector<1x4x256xf32> to vector<2x4x256xf32>
    %198 = arith.subf %193, %197 : vector<2x4x256xf32>
    %199 = arith.minimumf %188, %198 : vector<2x4x256xf32>
    %200 = vector.extract_strided_slice %142 {offsets = [0, 0, 32], sizes = [2, 4, 256], strides = [1, 1, 1]} : vector<2x4x290xf32> to vector<2x4x256xf32>
    %cst_29 = arith.constant 0.000000e+00 : f32
    %201 = vector.shape_cast %4 : vector<1x1x256xi1> to vector<1x1x256xi1>
    %202 = vector.broadcast %201 : vector<1x1x256xi1> to vector<2x4x256xi1>
    %203 = vector.broadcast %cst_29 : f32 to vector<2x4x256xf32>
    %204 = arith.select %202, %200, %203 : vector<2x4x256xi1>, vector<2x4x256xf32>
    %205 = vector.extract_strided_slice %9 {offsets = [15, 0, 0], sizes = [1, 4, 256], strides = [1, 1, 1]} : vector<18x4x256xf32> to vector<1x4x256xf32>
    %206 = vector.shape_cast %205 : vector<1x4x256xf32> to vector<4x256xf32>
    %207 = vector.shape_cast %206 : vector<4x256xf32> to vector<1x4x256xf32>
    %208 = vector.broadcast %207 : vector<1x4x256xf32> to vector<2x4x256xf32>
    %209 = arith.subf %204, %208 : vector<2x4x256xf32>
    %210 = arith.minimumf %199, %209 : vector<2x4x256xf32>
    %211 = vector.extract_strided_slice %142 {offsets = [0, 0, 33], sizes = [2, 4, 256], strides = [1, 1, 1]} : vector<2x4x290xf32> to vector<2x4x256xf32>
    %212 = vector.extract_strided_slice %9 {offsets = [16, 0, 0], sizes = [1, 4, 256], strides = [1, 1, 1]} : vector<18x4x256xf32> to vector<1x4x256xf32>
    %213 = vector.shape_cast %212 : vector<1x4x256xf32> to vector<4x256xf32>
    %214 = vector.shape_cast %213 : vector<4x256xf32> to vector<1x4x256xf32>
    %215 = vector.broadcast %214 : vector<1x4x256xf32> to vector<2x4x256xf32>
    %216 = arith.subf %211, %215 : vector<2x4x256xf32>
    %217 = arith.minimumf %210, %216 : vector<2x4x256xf32>
    %218 = vector.extract_strided_slice %142 {offsets = [0, 0, 34], sizes = [2, 4, 256], strides = [1, 1, 1]} : vector<2x4x290xf32> to vector<2x4x256xf32>
    %cst_30 = arith.constant 0.000000e+00 : f32
    %219 = vector.shape_cast %6 : vector<1x1x256xi1> to vector<1x1x256xi1>
    %220 = vector.broadcast %219 : vector<1x1x256xi1> to vector<2x4x256xi1>
    %221 = vector.broadcast %cst_30 : f32 to vector<2x4x256xf32>
    %222 = arith.select %220, %218, %221 : vector<2x4x256xi1>, vector<2x4x256xf32>
    %223 = vector.extract_strided_slice %9 {offsets = [17, 0, 0], sizes = [1, 4, 256], strides = [1, 1, 1]} : vector<18x4x256xf32> to vector<1x4x256xf32>
    %224 = vector.shape_cast %223 : vector<1x4x256xf32> to vector<4x256xf32>
    %225 = vector.shape_cast %224 : vector<4x256xf32> to vector<1x4x256xf32>
    %226 = vector.broadcast %225 : vector<1x4x256xf32> to vector<2x4x256xf32>
    %227 = arith.subf %222, %226 : vector<2x4x256xf32>
    %228 = arith.minimumf %217, %227 : vector<2x4x256xf32>
    %cst_31 = arith.constant dense<0xFF800000> : vector<2x256xf32>
    %229 = vector.multi_reduction <maximumf>, %228, %cst_31 [1] : vector<2x4x256xf32> to vector<2x256xf32>
    %230 = vector.shape_cast %229 : vector<2x256xf32> to vector<2x1x256xf32>
    %231 = vector.broadcast %230 : vector<2x1x256xf32> to vector<2x4x256xf32>
    %232 = arith.subf %228, %231 : vector<2x4x256xf32>
    %233 = math.exp %232 : vector<2x4x256xf32>
    %cst_32 = arith.constant dense<0.000000e+00> : vector<2x256xf32>
    %234 = vector.multi_reduction <add>, %233, %cst_32 [1] : vector<2x4x256xf32> to vector<2x256xf32>
    %235 = vector.shape_cast %234 : vector<2x256xf32> to vector<2x1x256xf32>
    %cst_33 = arith.constant 1.000000e+00 : f32
    %236 = vector.broadcast %cst_33 : f32 to vector<2x1x256xf32>
    %237 = arith.divf %236, %235 : vector<2x1x256xf32>
    %238 = vector.broadcast %237 : vector<2x1x256xf32> to vector<2x4x256xf32>
    %239 = arith.mulf %233, %238 : vector<2x4x256xf32>
    %240 = vector.extract_strided_slice %10 {offsets = [2, 0, 0], sizes = [1, 4, 1], strides = [1, 1, 1]} : vector<4x4x1xf32> to vector<1x4x1xf32>
    %241 = vector.shape_cast %240 : vector<1x4x1xf32> to vector<4x1xf32>
    %242 = vector.extract_strided_slice %10 {offsets = [3, 0, 0], sizes = [1, 4, 1], strides = [1, 1, 1]} : vector<4x4x1xf32> to vector<1x4x1xf32>
    %243 = vector.shape_cast %242 : vector<1x4x1xf32> to vector<4x1xf32>
    %cst_34 = arith.constant dense<0.000000e+00> : vector<2x4xf32>
    %244 = vector.multi_reduction <add>, %239, %cst_34 [2] : vector<2x4x256xf32> to vector<2x4xf32>
    %245 = vector.shape_cast %244 : vector<2x4xf32> to vector<2x4x1xf32>
    %cst_35 = arith.constant dense<0.000000e+00> : vector<4x1xf32>
    %246 = vector.multi_reduction <add>, %245, %cst_35 [0] : vector<2x4x1xf32> to vector<4x1xf32>
    %247 = vector.shape_cast %246 : vector<4x1xf32> to vector<1x4x1xf32>
    %cst_36 = arith.constant 0.001953125 : f32
    %248 = vector.broadcast %cst_36 : f32 to vector<1x4x1xf32>
    %249 = arith.mulf %247, %248 : vector<1x4x1xf32>
    %250 = vector.broadcast %249 : vector<1x4x1xf32> to vector<2x4x256xf32>
    %251 = arith.subf %239, %250 : vector<2x4x256xf32>
    %252 = arith.mulf %251, %251 : vector<2x4x256xf32>
    %cst_37 = arith.constant dense<0.000000e+00> : vector<2x4xf32>
    %253 = vector.multi_reduction <add>, %252, %cst_37 [2] : vector<2x4x256xf32> to vector<2x4xf32>
    %254 = vector.shape_cast %253 : vector<2x4xf32> to vector<2x4x1xf32>
    %cst_38 = arith.constant dense<0.000000e+00> : vector<4x1xf32>
    %255 = vector.multi_reduction <add>, %254, %cst_38 [0] : vector<2x4x1xf32> to vector<4x1xf32>
    %256 = vector.shape_cast %255 : vector<4x1xf32> to vector<1x4x1xf32>
    %cst_39 = arith.constant 0.001953125 : f32
    %257 = vector.broadcast %cst_39 : f32 to vector<1x4x1xf32>
    %258 = arith.mulf %256, %257 : vector<1x4x1xf32>
    %259 = vector.shape_cast %241 : vector<4x1xf32> to vector<1x4x1xf32>
    %cst_40 = arith.constant 9.99999974E-6 : f32
    %260 = vector.broadcast %cst_40 : f32 to vector<1x4x1xf32>
    %261 = arith.addf %258, %260 : vector<1x4x1xf32>
    %262 = math.rsqrt %261 : vector<1x4x1xf32>
    %263 = arith.mulf %259, %262 : vector<1x4x1xf32>
    %264 = vector.shape_cast %243 : vector<4x1xf32> to vector<1x4x1xf32>
    %265 = arith.mulf %249, %263 : vector<1x4x1xf32>
    %266 = arith.subf %264, %265 : vector<1x4x1xf32>
    %267 = vector.broadcast %263 : vector<1x4x1xf32> to vector<2x4x256xf32>
    %268 = arith.mulf %239, %267 : vector<2x4x256xf32>
    %269 = vector.broadcast %266 : vector<1x4x1xf32> to vector<2x4x256xf32>
    %270 = arith.addf %268, %269 : vector<2x4x256xf32>
    %cst_41 = arith.constant 0.000000e+00 : f32
    %271 = vector.broadcast %cst_41 : f32 to vector<2x4x256xf32>
    %272 = arith.maximumf %270, %271 : vector<2x4x256xf32>
    %c0_42 = arith.constant 0 : index
    %c0_43 = arith.constant 0 : index
    %c0_44 = arith.constant 0 : index
    %273 = vector.load %arg4[%c0_42, %c0_43, %c0_44] : memref<2x4x256xf32, #tpu.memory_space<vmem>>, vector<2x4x256xf32>
    tpu.vector_store %arg4[%c0_42, %c0_43, %c0_44], %272 {strides = array<i32>} : memref<2x4x256xf32, #tpu.memory_space<vmem>>, vector<2x4x256xf32>,
    return
  }
  func.func @transform_0(%arg0: i32) -> (i32, i32, i32) {
    %c0_i32 = arith.constant 0 : i32
    %c0_i32_0 = arith.constant 0 : i32
    %c0_i32_1 = arith.constant 0 : i32
    %c0_i32_2 = arith.constant 0 : i32
    return %c0_i32, %c0_i32_0, %c0_i32_1 : i32, i32, i32
  }
  func.func @transform_1(%arg0: i32) -> (i32, i32, i32) {
    %c0_i32 = arith.constant 0 : i32
    %c0_i32_0 = arith.constant 0 : i32
    %c0_i32_1 = arith.constant 0 : i32
    %c0_i32_2 = arith.constant 0 : i32
    return %c0_i32, %c0_i32_0, %c0_i32_1 : i32, i32, i32
  }
  func.func @transform_2(%arg0: i32) -> (i32, i32, i32) {
    %c0_i32 = arith.constant 0 : i32
    %c0_i32_0 = arith.constant 0 : i32
    %c0_i32_1 = arith.constant 0 : i32
    %c0_i32_2 = arith.constant 0 : i32
    return %c0_i32, %c0_i32_0, %c0_i32_1 : i32, i32, i32
  }
  func.func @transform_3(%arg0: i32) -> (i32, i32, i32) {
    %c0_i32 = arith.constant 0 : i32
    %c0_i32_0 = arith.constant 0 : i32
    %c0_i32_1 = arith.constant 0 : i32
    %c0_i32_2 = arith.constant 0 : i32
    return %c0_i32, %c0_i32_0, %c0_i32_1 : i32, i32, i32
  }
}

</mosaic_0001>

<llo_original>
// kernel: closing_forward.1
$region0: #{closing_forward.1}
  #allocation0 [shape = 'u32[]', space=smem, size = 0x4, offset = 0x4, fixed_abs, tag = 'smem constant byte address 0x4 - core index']
  #allocation1 [shape = 'u32[144,128]{1,0:T(1,128)}', space=vmem, size = 0x12000, scoped, tag = 'internal scratch']
  %s0 = inlined_call_operand.vmem [shape: f32[2,4,256], index: 0, kind: input, shape index: {}]
  %s1 = inlined_call_operand.vmem [shape: f32[18,4,1], index: 1, kind: input, shape index: {}]
  %s2 = inlined_call_operand.vmem [shape: f32[4,4,1], index: 2, kind: input, shape index: {}]
  %s3 = inlined_call_operand.vmem [shape: f32[2,4,256], index: 3, kind: output, shape index: {}]
  %s4 = sld [smem:[#allocation0]]
  $region22: #{closing_forward.1} parent=0
    _
  %s6 = ssub.s32 1, %s4
  %s7 = scalar_select 0, %s6, %s4
  // Predicated region
  $region2: #{closing_forward.1} parent=0 // pred_check
    _
  $region3: #{closing_forward.1} parent=0 // pred_check_branch
    %9 = sbr.rel (0) target = $region5
  $region4: #{closing_forward.1} parent=0 // pred_region
    _
  $region5: #{closing_forward.1} parent=0 // pred_fallthru
    _
  // Predicated region
  $region6: #{closing_forward.1} parent=0 // pred_check
    _
  $region7: #{closing_forward.1} parent=0 // pred_check_branch
    %11 = sbr.rel (0) target = $region9
  $region8: #{closing_forward.1} parent=0 // pred_region
    _
  $region9: #{closing_forward.1} parent=0 // pred_fallthru
    _
  // Predicated region
  $region10: #{closing_forward.1} parent=0 // pred_check
    _
  $region11: #{closing_forward.1} parent=0 // pred_check_branch
    %13 = sbr.rel (0) target = $region13
  $region12: #{closing_forward.1} parent=0 // pred_region
    _
  $region13: #{closing_forward.1} parent=0 // pred_fallthru
    _
  %v14 = vlaneseq
  %v15 = vand.u32 %v14, 127
  %v16 = vadd.s32 %v15, 128
  %v17 = vand.u32 %v15, 15
  %v18 = vand.u32 %v16, 15
  %vm19 = vcmp.ge.s32.totalorder %v17, 1
  %vm20 = vcmp.ge.s32.totalorder %v18, 1
  %vm21 = vcmp.lt.s32.totalorder %v17, 15
  %vm22 = vcmp.lt.s32.totalorder %v18, 15
  %v23 = vld [vmem:[%s1] sm:$0xf]
  %v24 = vld [vmem:[%s1 + $0x4] sm:$0xf]
  %v25 = vld [vmem:[%s1 + $0x8] sm:$0xf]
  %v26 = vld [vmem:[%s1 + $0xc] sm:$0xf]
  %v27 = vld [vmem:[%s1 + $0x10] sm:$0xf]
  %v28 = vld [vmem:[%s1 + $0x14] sm:$0xf]
  %v29 = vld [vmem:[%s1 + $0x18] sm:$0xf]
  %v30 = vld [vmem:[%s1 + $0x1c] sm:$0xf]
  %v31 = vld [vmem:[%s1 + $0x20] sm:$0xf]
  %v32 = vld [vmem:[%s1 + $0x24] sm:$0xf]
  %v33 = vld [vmem:[%s1 + $0x28] sm:$0xf]
  %v34 = vld [vmem:[%s1 + $0x2c] sm:$0xf]
  %v35 = vld [vmem:[%s1 + $0x30] sm:$0xf]
  %v36 = vld [vmem:[%s1 + $0x34] sm:$0xf]
  %v37 = vld [vmem:[%s1 + $0x38] sm:$0xf]
  %v38 = vld [vmem:[%s1 + $0x3c] sm:$0xf]
  %v39 = vld [vmem:[%s1 + $0x40] sm:$0xf]
  %v40 = vld [vmem:[%s1 + $0x44] sm:$0xf]
  %v41 = vld [vmem:[%s2] sm:$0xf]
  %v42 = vld [vmem:[%s2 + $0x4] sm:$0xf]
  %v43 = vld [vmem:[%s2 + $0x8] sm:$0xf]
  %v44 = vld [vmem:[%s2 + $0xc] sm:$0xf]
  %v45 = vld [vmem:[%s0] sm:$0xff]
  %v46 = vld [vmem:[%s0 + $0x8] sm:$0xff]
  %v49 = vcombine.high %v45, %v45
  %v50 = vcombine.high %v46, %v46
  %51 = vrot.lane.b32.xlu0 %v45, 17
  %v52 = vpop.permute.xlu0 %51
  %53 = vrot.lane.b32.xlu0 %v49, 17
  %v54 = vpop.permute.xlu0 %53
  %55 = vrot.lane.b32.xlu0 %v46, 17
  %v56 = vpop.permute.xlu0 %55
  %57 = vrot.lane.b32.xlu0 %v50, 17
  %v58 = vpop.permute.xlu0 %57
  %vm59 = vcmask 138240
  %v60 = vsel %vm59, %v52, %v54
  %v61 = vsel %vm59, %v56, %v58
  %v68 = vsel %vm59, 0.0, %v52
  %v69 = vsel %vm59, 0.0, %v56
  %v70 = vsel %vm59, %v54, 0.0
  %v71 = vsel %vm59, %v58, 0.0
  %v72 = vsel %vm19, 1, 0
  %v73 = vsel %vm20, 1, 0
  %vm74 = vcmp.eq.s32.totalorder %v72, 1
  %vm75 = vcmp.eq.s32.totalorder %v73, 1
  %v76 = vsel %vm74, %v68, 0.0
  %v77 = vsel %vm75, %v60, 0.0
  %v78 = vsel %vm74, %v69, 0.0
  %v79 = vsel %vm75, %v61, 0.0
  %81 = vset.pattern.permute.xlu0 0
  %82 = vperm.xlu0 %81, %v23
  %v83 = vpop.permute.xlu0 %82
  %v85 = vadd.f32 %v76, %v83
  %v86 = vadd.f32 %v77, %v83
  %v87 = vadd.f32 %v78, %v83
  %v88 = vadd.f32 %v79, %v83
  %90 = vset.pattern.permute.xlu0 0
  %91 = vperm.xlu0 %90, %v24
  %v92 = vpop.permute.xlu0 %91
  %v94 = vadd.f32 %v68, %v92
  %v95 = vadd.f32 %v60, %v92
  %v96 = vadd.f32 %v70, %v92
  %v97 = vadd.f32 %v69, %v92
  %v98 = vadd.f32 %v61, %v92
  %v99 = vadd.f32 %v71, %v92
  %106 = vrot.lane.b32.xlu0 %v94, 127
  %v107 = vpop.permute.xlu0 %106
  %108 = vrot.lane.b32.xlu0 %v95, 127
  %v109 = vpop.permute.xlu0 %108
  %110 = vrot.lane.b32.xlu0 %v96, 127
  %v111 = vpop.permute.xlu0 %110
  %112 = vrot.lane.b32.xlu0 %v97, 127
  %v113 = vpop.permute.xlu0 %112
  %114 = vrot.lane.b32.xlu0 %v98, 127
  %v115 = vpop.permute.xlu0 %114
  %116 = vrot.lane.b32.xlu0 %v99, 127
  %v117 = vpop.permute.xlu0 %116
  %vm118 = vcmask 1039360
  %v119 = vsel %vm118, %v107, %v109
  %v120 = vsel %vm118, %v109, %v111
  %v121 = vsel %vm118, %v113, %v115
  %v122 = vsel %vm118, %v115, %v117
  %v127 = vmax.f32 %v85, %v119
  %v128 = vmax.f32 %v86, %v120
  %v129 = vmax.f32 %v87, %v121
  %v130 = vmax.f32 %v88, %v122
  %v131 = vsel %vm21, 1, 0
  %v132 = vsel %vm22, 1, 0
  %vm133 = vcmp.eq.s32.totalorder %v131, 1
  %vm134 = vcmp.eq.s32.totalorder %v132, 1
  %139 = vrot.lane.b32.xlu0 %v68, 126
  %v140 = vpop.permute.xlu0 %139
  %141 = vrot.lane.b32.xlu0 %v60, 126
  %v142 = vpop.permute.xlu0 %141
  %143 = vrot.lane.b32.xlu0 %v70, 126
  %v144 = vpop.permute.xlu0 %143
  %145 = vrot.lane.b32.xlu0 %v69, 126
  %v146 = vpop.permute.xlu0 %145
  %147 = vrot.lane.b32.xlu0 %v61, 126
  %v148 = vpop.permute.xlu0 %147
  %149 = vrot.lane.b32.xlu0 %v71, 126
  %v150 = vpop.permute.xlu0 %149
  %vm151 = vcmask 1031168
  %v152 = vsel %vm151, %v140, %v142
  %v153 = vsel %vm151, %v142, %v144
  %v154 = vsel %vm151, %v146, %v148
  %v155 = vsel %vm151, %v148, %v150
  %v160 = vsel %vm133, %v152, 0.0
  %v161 = vsel %vm134, %v153, 0.0
  %v162 = vsel %vm133, %v154, 0.0
  %v163 = vsel %vm134, %v155, 0.0
  %165 = vset.pattern.permute.xlu0 0
  %166 = vperm.xlu0 %165, %v25
  %v167 = vpop.permute.xlu0 %166
  %v169 = vadd.f32 %v160, %v167
  %v170 = vadd.f32 %v161, %v167
  %v171 = vadd.f32 %v162, %v167
  %v172 = vadd.f32 %v163, %v167
  %v173 = vmax.f32 %v127, %v169
  %v174 = vmax.f32 %v128, %v170
  %v175 = vmax.f32 %v129, %v171
  %v176 = vmax.f32 %v130, %v172
  %177 = vrot.lane.b32.xlu0 %v68, 112
  %v178 = vpop.permute.xlu0 %177
  %179 = vrot.lane.b32.xlu0 %v60, 112
  %v180 = vpop.permute.xlu0 %179
  %181 = vrot.lane.b32.xlu0 %v70, 112
  %v182 = vpop.permute.xlu0 %181
  %183 = vrot.lane.b32.xlu0 %v69, 112
  %v184 = vpop.permute.xlu0 %183
  %185 = vrot.lane.b32.xlu0 %v61, 112
  %v186 = vpop.permute.xlu0 %185
  %187 = vrot.lane.b32.xlu0 %v71, 112
  %v188 = vpop.permute.xlu0 %187
  %vm189 = vcmask 916480
  %v190 = vsel %vm189, %v178, %v180
  %v191 = vsel %vm189, %v180, %v182
  %v192 = vsel %vm189, %v184, %v186
  %v193 = vsel %vm189, %v186, %v188
  %v198 = vsel %vm74, %v190, 0.0
  %v199 = vsel %vm75, %v191, 0.0
  %v200 = vsel %vm74, %v192, 0.0
  %v201 = vsel %vm75, %v193, 0.0
  %203 = vset.pattern.permute.xlu0 0
  %204 = vperm.xlu0 %203, %v26
  %v205 = vpop.permute.xlu0 %204
  %v207 = vadd.f32 %v198, %v205
  %v208 = vadd.f32 %v199, %v205
  %v209 = vadd.f32 %v200, %v205
  %v210 = vadd.f32 %v201, %v205
  %v211 = vmax.f32 %v173, %v207
  %v212 = vmax.f32 %v174, %v208
  %v213 = vmax.f32 %v175, %v209
  %v214 = vmax.f32 %v176, %v210
  %216 = vset.pattern.permute.xlu0 0
  %217 = vperm.xlu0 %216, %v27
  %v218 = vpop.permute.xlu0 %217
  %v220 = vadd.f32 %v68, %v218
  %v221 = vadd.f32 %v60, %v218
  %v222 = vadd.f32 %v70, %v218
  %v223 = vadd.f32 %v69, %v218
  %v224 = vadd.f32 %v61, %v218
  %v225 = vadd.f32 %v71, %v218
  %232 = vrot.lane.b32.xlu0 %v220, 111
  %v233 = vpop.permute.xlu0 %232
  %234 = vrot.lane.b32.xlu0 %v221, 111
  %v235 = vpop.permute.xlu0 %234
  %236 = vrot.lane.b32.xlu0 %v222, 111
  %v237 = vpop.permute.xlu0 %236
  %238 = vrot.lane.b32.xlu0 %v223, 111
  %v239 = vpop.permute.xlu0 %238
  %240 = vrot.lane.b32.xlu0 %v224, 111
  %v241 = vpop.permute.xlu0 %240
  %242 = vrot.lane.b32.xlu0 %v225, 111
  %v243 = vpop.permute.xlu0 %242
  %vm244 = vcmask 908288
  %v245 = vsel %vm244, %v233, %v235
  %v246 = vsel %vm244, %v235, %v237
  %v247 = vsel %vm244, %v239, %v241
  %v248 = vsel %vm244, %v241, %v243
  %v253 = vmax.f32 %v211, %v245
  %v254 = vmax.f32 %v212, %v246
  %v255 = vmax.f32 %v213, %v247
  %v256 = vmax.f32 %v214, %v248
  %257 = vrot.lane.b32.xlu0 %v68, 110
  %v258 = vpop.permute.xlu0 %257
  %259 = vrot.lane.b32.xlu0 %v60, 110
  %v260 = vpop.permute.xlu0 %259
  %261 = vrot.lane.b32.xlu0 %v70, 110
  %v262 = vpop.permute.xlu0 %261
  %263 = vrot.lane.b32.xlu0 %v69, 110
  %v264 = vpop.permute.xlu0 %263
  %265 = vrot.lane.b32.xlu0 %v61, 110
  %v266 = vpop.permute.xlu0 %265
  %267 = vrot.lane.b32.xlu0 %v71, 110
  %v268 = vpop.permute.xlu0 %267
  %vm269 = vcmask 900096
  %v270 = vsel %vm269, %v258, %v260
  %v271 = vsel %vm269, %v260, %v262
  %v272 = vsel %vm269, %v264, %v266
  %v273 = vsel %vm269, %v266, %v268
  %v278 = vsel %vm133, %v270, 0.0
  %v279 = vsel %vm134, %v271, 0.0
  %v280 = vsel %vm133, %v272, 0.0
  %v281 = vsel %vm134, %v273, 0.0
  %283 = vset.pattern.permute.xlu0 0
  %284 = vperm.xlu0 %283, %v28
  %v285 = vpop.permute.xlu0 %284
  %v287 = vadd.f32 %v278, %v285
  %v288 = vadd.f32 %v279, %v285
  %v289 = vadd.f32 %v280, %v285
  %v290 = vadd.f32 %v281, %v285
  %v291 = vmax.f32 %v253, %v287
  %v292 = vmax.f32 %v254, %v288
  %v293 = vmax.f32 %v255, %v289
  %v294 = vmax.f32 %v256, %v290
  %295 = vrot.lane.b32.xlu0 %v68, 96
  %v296 = vpop.permute.xlu0 %295
  %297 = vrot.lane.b32.xlu0 %v60, 96
  %v298 = vpop.permute.xlu0 %297
  %299 = vrot.lane.b32.xlu0 %v70, 96
  %v300 = vpop.permute.xlu0 %299
  %301 = vrot.lane.b32.xlu0 %v69, 96
  %v302 = vpop.permute.xlu0 %301
  %303 = vrot.lane.b32.xlu0 %v61, 96
  %v304 = vpop.permute.xlu0 %303
  %305 = vrot.lane.b32.xlu0 %v71, 96
  %v306 = vpop.permute.xlu0 %305
  %vm307 = vcmask 785408
  %v308 = vsel %vm307, %v296, %v298
  %v309 = vsel %vm307, %v298, %v300
  %v310 = vsel %vm307, %v302, %v304
  %v311 = vsel %vm307, %v304, %v306
  %v316 = vsel %vm74, %v308, 0.0
  %v317 = vsel %vm75, %v309, 0.0
  %v318 = vsel %vm74, %v310, 0.0
  %v319 = vsel %vm75, %v311, 0.0
  %321 = vset.pattern.permute.xlu0 0
  %322 = vperm.xlu0 %321, %v29
  %v323 = vpop.permute.xlu0 %322
  %v325 = vadd.f32 %v316, %v323
  %v326 = vadd.f32 %v317, %v323
  %v327 = vadd.f32 %v318, %v323
  %v328 = vadd.f32 %v319, %v323
  %v329 = vmax.f32 %v291, %v325
  %v330 = vmax.f32 %v292, %v326
  %v331 = vmax.f32 %v293, %v327
  %v332 = vmax.f32 %v294, %v328
  %334 = vset.pattern.permute.xlu0 0
  %335 = vperm.xlu0 %334, %v30
  %v336 = vpop.permute.xlu0 %335
  %v338 = vadd.f32 %v68, %v336
  %v339 = vadd.f32 %v60, %v336
  %v340 = vadd.f32 %v70, %v336
  %v341 = vadd.f32 %v69, %v336
  %v342 = vadd.f32 %v61, %v336
  %v343 = vadd.f32 %v71, %v336
  %350 = vrot.lane.b32.xlu0 %v338, 95
  %v351 = vpop.permute.xlu0 %350
  %352 = vrot.lane.b32.xlu0 %v339, 95
  %v353 = vpop.permute.xlu0 %352
  %354 = vrot.lane.b32.xlu0 %v340, 95
  %v355 = vpop.permute.xlu0 %354
  %356 = vrot.lane.b32.xlu0 %v341, 95
  %v357 = vpop.permute.xlu0 %356
  %358 = vrot.lane.b32.xlu0 %v342, 95
  %v359 = vpop.permute.xlu0 %358
  %360 = vrot.lane.b32.xlu0 %v343, 95
  %v361 = vpop.permute.xlu0 %360
  %vm362 = vcmask 777216
  %v363 = vsel %vm362, %v351, %v353
  %v364 = vsel %vm362, %v353, %v355
  %v365 = vsel %vm362, %v357, %v359
  %v366 = vsel %vm362, %v359, %v361
  %v371 = vmax.f32 %v329, %v363
  %v372 = vmax.f32 %v330, %v364
  %v373 = vmax.f32 %v331, %v365
  %v374 = vmax.f32 %v332, %v366
  %375 = vrot.lane.b32.xlu0 %v68, 94
  %v376 = vpop.permute.xlu0 %375
  %377 = vrot.lane.b32.xlu0 %v60, 94
  %v378 = vpop.permute.xlu0 %377
  %379 = vrot.lane.b32.xlu0 %v70, 94
  %v380 = vpop.permute.xlu0 %379
  %381 = vrot.lane.b32.xlu0 %v69, 94
  %v382 = vpop.permute.xlu0 %381
  %383 = vrot.lane.b32.xlu0 %v61, 94
  %v384 = vpop.permute.xlu0 %383
  %385 = vrot.lane.b32.xlu0 %v71, 94
  %v386 = vpop.permute.xlu0 %385
  %vm387 = vcmask 769024
  %v388 = vsel %vm387, %v376, %v378
  %v389 = vsel %vm387, %v378, %v380
  %v390 = vsel %vm387, %v382, %v384
  %v391 = vsel %vm387, %v384, %v386
  %v396 = vsel %vm133, %v388, 0.0
  %v397 = vsel %vm134, %v389, 0.0
  %v398 = vsel %vm133, %v390, 0.0
  %v399 = vsel %vm134, %v391, 0.0
  %401 = vset.pattern.permute.xlu0 0
  %402 = vperm.xlu0 %401, %v31
  %v403 = vpop.permute.xlu0 %402
  %v405 = vadd.f32 %v396, %v403
  %v406 = vadd.f32 %v397, %v403
  %v407 = vadd.f32 %v398, %v403
  %v408 = vadd.f32 %v399, %v403
  %v409 = vmax.f32 %v371, %v405
  %v410 = vmax.f32 %v372, %v406
  %v411 = vmax.f32 %v373, %v407
  %v412 = vmax.f32 %v374, %v408
  %vm413 = vcmask 1043456
  %v414 = vsel %vm413, %v409, -inf
  %v415 = vrot.slane %v414, 4
  %v416 = vmax.f32 %v414, %v415
  %v417 = vrot.slane %v416, 2
  %v418 = vmax.f32 %v416, %v417
  %v419 = vrot.slane %v418, 1
  %v420 = vmax.f32 %v418, %v419
  %v421 = vsel %vm413, %v410, -inf
  %v422 = vrot.slane %v421, 4
  %v423 = vmax.f32 %v421, %v422
  %v424 = vrot.slane %v423, 2
  %v425 = vmax.f32 %v423, %v424
  %v426 = vrot.slane %v425, 1
  %v427 = vmax.f32 %v425, %v426
  %v428 = vsel %vm413, %v411, -inf
  %v429 = vrot.slane %v428, 4
  %v430 = vmax.f32 %v428, %v429
  %v431 = vrot.slane %v430, 2
  %v432 = vmax.f32 %v430, %v431
  %v433 = vrot.slane %v432, 1
  %v434 = vmax.f32 %v432, %v433
  %v435 = vsel %vm413, %v412, -inf
  %v436 = vrot.slane %v435, 4
  %v437 = vmax.f32 %v435, %v436
  %v438 = vrot.slane %v437, 2
  %v439 = vmax.f32 %v437, %v438
  %v440 = vrot.slane %v439, 1
  %v441 = vmax.f32 %v439, %v440
  %v442 = vsub.f32 %v409, %v420
  %v443 = vsub.f32 %v410, %v427
  %v444 = vsub.f32 %v411, %v434
  %v445 = vsub.f32 %v412, %v441
  %v446 = vmul.f32 %v442, 1.442695
  %v447 = vpow.pop %v446
  %v448 = vmul.f32 %v443, 1.442695
  %v449 = vpow.pop %v448
  %v450 = vmul.f32 %v444, 1.442695
  %v451 = vpow.pop %v450
  %v452 = vmul.f32 %v445, 1.442695
  %v453 = vpow.pop %v452
  %v454 = vsel %vm413, %v447, 0.0
  %v455 = vrot.slane %v454, 4
  %v456 = vadd.f32 %v454, %v455
  %v457 = vrot.slane %v456, 2
  %v458 = vadd.f32 %v456, %v457
  %v459 = vrot.slane %v458, 1
  %v460 = vadd.f32 %v458, %v459
  %v461 = vsel %vm413, %v449, 0.0
  %v462 = vrot.slane %v461, 4
  %v463 = vadd.f32 %v461, %v462
  %v464 = vrot.slane %v463, 2
  %v465 = vadd.f32 %v463, %v464
  %v466 = vrot.slane %v465, 1
  %v467 = vadd.f32 %v465, %v466
  %v468 = vsel %vm413, %v451, 0.0
  %v469 = vrot.slane %v468, 4
  %v470 = vadd.f32 %v468, %v469
  %v471 = vrot.slane %v470, 2
  %v472 = vadd.f32 %v470, %v471
  %v473 = vrot.slane %v472, 1
  %v474 = vadd.f32 %v472, %v473
  %v475 = vsel %vm413, %v453, 0.0
  %v476 = vrot.slane %v475, 4
  %v477 = vadd.f32 %v475, %v476
  %v478 = vrot.slane %v477, 2
  %v479 = vadd.f32 %v477, %v478
  %v480 = vrot.slane %v479, 1
  %v481 = vadd.f32 %v479, %v480
  %v482 = vrcp.pop %v460
  %v483 = vmul.f32 1.0, %v482
  %v484 = vrcp.pop %v467
  %v485 = vmul.f32 1.0, %v484
  %v486 = vrcp.pop %v474
  %v487 = vmul.f32 1.0, %v486
  %v488 = vrcp.pop %v481
  %v489 = vmul.f32 1.0, %v488
  %v490 = vmul.f32 %v447, %v483
  %v491 = vmul.f32 %v449, %v485
  %v492 = vmul.f32 %v451, %v487
  %v493 = vmul.f32 %v453, %v489
  %v494 = vsel %vm413, %v490, 0.0
  %v495 = vsel %vm413, %v491, 0.0
  %v496 = vadd.f32 %v494, %v495
  %497 = vadd.xlane.f32.xlu0 %v496
  %v498 = vpop.xlane.xlu0 %497
  %v499 = vsel %vm413, %v492, 0.0
  %v500 = vsel %vm413, %v493, 0.0
  %v501 = vadd.f32 %v499, %v500
  %502 = vadd.xlane.f32.xlu0 %v501
  %v503 = vpop.xlane.xlu0 %502
  %v504 = vsel %vm413, %v498, 0.0
  %v505 = vsel %vm413, %v503, 0.0
  %v506 = vadd.f32 %v504, %v505
  %v507 = vmul.f32 %v506, 0.001953125
  %v508 = vsub.f32 %v490, %v507
  %v509 = vsub.f32 %v491, %v507
  %v510 = vsub.f32 %v492, %v507
  %v511 = vsub.f32 %v493, %v507
  %v512 = vmul.f32 %v508, %v508
  %v513 = vmul.f32 %v509, %v509
  %v514 = vmul.f32 %v510, %v510
  %v515 = vmul.f32 %v511, %v511
  %v516 = vsel %vm413, %v512, 0.0
  %v517 = vsel %vm413, %v513, 0.0
  %v518 = vadd.f32 %v516, %v517
  %519 = vadd.xlane.f32.xlu0 %v518
  %v520 = vpop.xlane.xlu0 %519
  %v521 = vsel %vm413, %v514, 0.0
  %v522 = vsel %vm413, %v515, 0.0
  %v523 = vadd.f32 %v521, %v522
  %524 = vadd.xlane.f32.xlu0 %v523
  %v525 = vpop.xlane.xlu0 %524
  %v526 = vsel %vm413, %v520, 0.0
  %v527 = vsel %vm413, %v525, 0.0
  %v528 = vadd.f32 %v526, %v527
  %v529 = vmul.f32 %v528, 0.001953125
  %v530 = vadd.f32 %v529, 1e-05
  %v531 = vrsqrt.pop %v530
  %v532 = vmul.f32 %v41, %v531
  %v533 = vmul.f32 %v507, %v532
  %v534 = vsub.f32 %v42, %v533
  %536 = vset.pattern.permute.xlu0 0
  %537 = vperm.xlu0 %536, %v532
  %v538 = vpop.permute.xlu0 %537
  %v540 = vmul.f32 %v490, %v538
  %v541 = vmul.f32 %v491, %v538
  %v542 = vmul.f32 %v492, %v538
  %v543 = vmul.f32 %v493, %v538
  %545 = vset.pattern.permute.xlu0 0
  %546 = vperm.xlu0 %545, %v534
  %v547 = vpop.permute.xlu0 %546
  %v549 = vadd.f32 %v540, %v547
  %v550 = vadd.f32 %v541, %v547
  %v551 = vadd.f32 %v542, %v547
  %v552 = vadd.f32 %v543, %v547
  %557 = vrot.lane.b32.xlu0 %v549, 17
  %v558 = vpop.permute.xlu0 %557
  %559 = vrot.lane.b32.xlu0 %v550, 17
  %v560 = vpop.permute.xlu0 %559
  %561 = vrot.lane.b32.xlu0 %v551, 17
  %v562 = vpop.permute.xlu0 %561
  %563 = vrot.lane.b32.xlu0 %v552, 17
  %v564 = vpop.permute.xlu0 %563
  %v565 = vsel %vm59, %v558, %v560
  %v566 = vsel %vm59, %v562, %v564
  %v573 = vsel %vm59, 0.0, %v558
  %v574 = vsel %vm59, 0.0, %v562
  %v575 = vsel %vm59, %v560, 0.0
  %v576 = vsel %vm59, %v564, 0.0
  %v577 = vsel %vm74, %v573, 0.0
  %v578 = vsel %vm75, %v565, 0.0
  %v579 = vsel %vm74, %v574, 0.0
  %v580 = vsel %vm75, %v566, 0.0
  %582 = vset.pattern.permute.xlu0 0
  %583 = vperm.xlu0 %582, %v32
  %v584 = vpop.permute.xlu0 %583
  %v586 = vsub.f32 %v577, %v584
  %v587 = vsub.f32 %v578, %v584
  %v588 = vsub.f32 %v579, %v584
  %v589 = vsub.f32 %v580, %v584
  %591 = vset.pattern.permute.xlu0 0
  %592 = vperm.xlu0 %591, %v33
  %v593 = vpop.permute.xlu0 %592
  %v595 = vsub.f32 %v573, %v593
  %v596 = vsub.f32 %v565, %v593
  %v597 = vsub.f32 %v575, %v593
  %v598 = vsub.f32 %v574, %v593
  %v599 = vsub.f32 %v566, %v593
  %v600 = vsub.f32 %v576, %v593
  %607 = vrot.lane.b32.xlu0 %v595, 127
  %v608 = vpop.permute.xlu0 %607
  %609 = vrot.lane.b32.xlu0 %v596, 127
  %v610 = vpop.permute.xlu0 %609
  %611 = vrot.lane.b32.xlu0 %v597, 127
  %v612 = vpop.permute.xlu0 %611
  %613 = vrot.lane.b32.xlu0 %v598, 127
  %v614 = vpop.permute.xlu0 %613
  %615 = vrot.lane.b32.xlu0 %v599, 127
  %v616 = vpop.permute.xlu0 %615
  %617 = vrot.lane.b32.xlu0 %v600, 127
  %v618 = vpop.permute.xlu0 %617
  %v619 = vsel %vm118, %v608, %v610
  %v620 = vsel %vm118, %v610, %v612
  %v621 = vsel %vm118, %v614, %v616
  %v622 = vsel %vm118, %v616, %v618
  %v627 = vmin.f32 %v586, %v619
  %v628 = vmin.f32 %v587, %v620
  %v629 = vmin.f32 %v588, %v621
  %v630 = vmin.f32 %v589, %v622
  %635 = vrot.lane.b32.xlu0 %v573, 126
  %v636 = vpop.permute.xlu0 %635
  %637 = vrot.lane.b32.xlu0 %v565, 126
  %v638 = vpop.permute.xlu0 %637
  %639 = vrot.lane.b32.xlu0 %v575, 126
  %v640 = vpop.permute.xlu0 %639
  %641 = vrot.lane.b32.xlu0 %v574, 126
  %v642 = vpop.permute.xlu0 %641
  %643 = vrot.lane.b32.xlu0 %v566, 126
  %v644 = vpop.permute.xlu0 %643
  %645 = vrot.lane.b32.xlu0 %v576, 126
  %v646 = vpop.permute.xlu0 %645
  %v647 = vsel %vm151, %v636, %v638
  %v648 = vsel %vm151, %v638, %v640
  %v649 = vsel %vm151, %v642, %v644
  %v650 = vsel %vm151, %v644, %v646
  %v655 = vsel %vm133, %v647, 0.0
  %v656 = vsel %vm134, %v648, 0.0
  %v657 = vsel %vm133, %v649, 0.0
  %v658 = vsel %vm134, %v650, 0.0
  %660 = vset.pattern.permute.xlu0 0
  %661 = vperm.xlu0 %660, %v34
  %v662 = vpop.permute.xlu0 %661
  %v664 = vsub.f32 %v655, %v662
  %v665 = vsub.f32 %v656, %v662
  %v666 = vsub.f32 %v657, %v662
  %v667 = vsub.f32 %v658, %v662
  %v668 = vmin.f32 %v627, %v664
  %v669 = vmin.f32 %v628, %v665
  %v670 = vmin.f32 %v629, %v666
  %v671 = vmin.f32 %v630, %v667
  %672 = vrot.lane.b32.xlu0 %v573, 112
  %v673 = vpop.permute.xlu0 %672
  %674 = vrot.lane.b32.xlu0 %v565, 112
  %v675 = vpop.permute.xlu0 %674
  %676 = vrot.lane.b32.xlu0 %v575, 112
  %v677 = vpop.permute.xlu0 %676
  %678 = vrot.lane.b32.xlu0 %v574, 112
  %v679 = vpop.permute.xlu0 %678
  %680 = vrot.lane.b32.xlu0 %v566, 112
  %v681 = vpop.permute.xlu0 %680
  %682 = vrot.lane.b32.xlu0 %v576, 112
  %v683 = vpop.permute.xlu0 %682
  %v684 = vsel %vm189, %v673, %v675
  %v685 = vsel %vm189, %v675, %v677
  %v686 = vsel %vm189, %v679, %v681
  %v687 = vsel %vm189, %v681, %v683
  %v692 = vsel %vm74, %v684, 0.0
  %v693 = vsel %vm75, %v685, 0.0
  %v694 = vsel %vm74, %v686, 0.0
  %v695 = vsel %vm75, %v687, 0.0
  %697 = vset.pattern.permute.xlu0 0
  %698 = vperm.xlu0 %697, %v35
  %v699 = vpop.permute.xlu0 %698
  %v701 = vsub.f32 %v692, %v699
  %v702 = vsub.f32 %v693, %v699
  %v703 = vsub.f32 %v694, %v699
  %v704 = vsub.f32 %v695, %v699
  %v705 = vmin.f32 %v668, %v701
  %v706 = vmin.f32 %v669, %v702
  %v707 = vmin.f32 %v670, %v703
  %v708 = vmin.f32 %v671, %v704
  %710 = vset.pattern.permute.xlu0 0
  %711 = vperm.xlu0 %710, %v36
  %v712 = vpop.permute.xlu0 %711
  %v714 = vsub.f32 %v573, %v712
  %v715 = vsub.f32 %v565, %v712
  %v716 = vsub.f32 %v575, %v712
  %v717 = vsub.f32 %v574, %v712
  %v718 = vsub.f32 %v566, %v712
  %v719 = vsub.f32 %v576, %v712
  %726 = vrot.lane.b32.xlu0 %v714, 111
  %v727 = vpop.permute.xlu0 %726
  %728 = vrot.lane.b32.xlu0 %v715, 111
  %v729 = vpop.permute.xlu0 %728
  %730 = vrot.lane.b32.xlu0 %v716, 111
  %v731 = vpop.permute.xlu0 %730
  %732 = vrot.lane.b32.xlu0 %v717, 111
  %v733 = vpop.permute.xlu0 %732
  %734 = vrot.lane.b32.xlu0 %v718, 111
  %v735 = vpop.permute.xlu0 %734
  %736 = vrot.lane.b32.xlu0 %v719, 111
  %v737 = vpop.permute.xlu0 %736
  %v738 = vsel %vm244, %v727, %v729
  %v739 = vsel %vm244, %v729, %v731
  %v740 = vsel %vm244, %v733, %v735
  %v741 = vsel %vm244, %v735, %v737
  %v746 = vmin.f32 %v705, %v738
  %v747 = vmin.f32 %v706, %v739
  %v748 = vmin.f32 %v707, %v740
  %v749 = vmin.f32 %v708, %v741
  %750 = vrot.lane.b32.xlu0 %v573, 110
  %v751 = vpop.permute.xlu0 %750
  %752 = vrot.lane.b32.xlu0 %v565, 110
  %v753 = vpop.permute.xlu0 %752
  %754 = vrot.lane.b32.xlu0 %v575, 110
  %v755 = vpop.permute.xlu0 %754
  %756 = vrot.lane.b32.xlu0 %v574, 110
  %v757 = vpop.permute.xlu0 %756
  %758 = vrot.lane.b32.xlu0 %v566, 110
  %v759 = vpop.permute.xlu0 %758
  %760 = vrot.lane.b32.xlu0 %v576, 110
  %v761 = vpop.permute.xlu0 %760
  %v762 = vsel %vm269, %v751, %v753
  %v763 = vsel %vm269, %v753, %v755
  %v764 = vsel %vm269, %v757, %v759
  %v765 = vsel %vm269, %v759, %v761
  %v770 = vsel %vm133, %v762, 0.0
  %v771 = vsel %vm134, %v763, 0.0
  %v772 = vsel %vm133, %v764, 0.0
  %v773 = vsel %vm134, %v765, 0.0
  %775 = vset.pattern.permute.xlu0 0
  %776 = vperm.xlu0 %775, %v37
  %v777 = vpop.permute.xlu0 %776
  %v779 = vsub.f32 %v770, %v777
  %v780 = vsub.f32 %v771, %v777
  %v781 = vsub.f32 %v772, %v777
  %v782 = vsub.f32 %v773, %v777
  %v783 = vmin.f32 %v746, %v779
  %v784 = vmin.f32 %v747, %v780
  %v785 = vmin.f32 %v748, %v781
  %v786 = vmin.f32 %v749, %v782
  %787 = vrot.lane.b32.xlu0 %v573, 96
  %v788 = vpop.permute.xlu0 %787
  %789 = vrot.lane.b32.xlu0 %v565, 96
  %v790 = vpop.permute.xlu0 %789
  %791 = vrot.lane.b32.xlu0 %v575, 96
  %v792 = vpop.permute.xlu0 %791
  %793 = vrot.lane.b32.xlu0 %v574, 96
  %v794 = vpop.permute.xlu0 %793
  %795 = vrot.lane.b32.xlu0 %v566, 96
  %v796 = vpop.permute.xlu0 %795
  %797 = vrot.lane.b32.xlu0 %v576, 96
  %v798 = vpop.permute.xlu0 %797
  %v799 = vsel %vm307, %v788, %v790
  %v800 = vsel %vm307, %v790, %v792
  %v801 = vsel %vm307, %v794, %v796
  %v802 = vsel %vm307, %v796, %v798
  %v807 = vsel %vm74, %v799, 0.0
  %v808 = vsel %vm75, %v800, 0.0
  %v809 = vsel %vm74, %v801, 0.0
  %v810 = vsel %vm75, %v802, 0.0
  %812 = vset.pattern.permute.xlu0 0
  %813 = vperm.xlu0 %812, %v38
  %v814 = vpop.permute.xlu0 %813
  %v816 = vsub.f32 %v807, %v814
  %v817 = vsub.f32 %v808, %v814
  %v818 = vsub.f32 %v809, %v814
  %v819 = vsub.f32 %v810, %v814
  %v820 = vmin.f32 %v783, %v816
  %v821 = vmin.f32 %v784, %v817
  %v822 = vmin.f32 %v785, %v818
  %v823 = vmin.f32 %v786, %v819
  %825 = vset.pattern.permute.xlu0 0
  %826 = vperm.xlu0 %825, %v39
  %v827 = vpop.permute.xlu0 %826
  %v829 = vsub.f32 %v573, %v827
  %v830 = vsub.f32 %v565, %v827
  %v831 = vsub.f32 %v575, %v827
  %v832 = vsub.f32 %v574, %v827
  %v833 = vsub.f32 %v566, %v827
  %v834 = vsub.f32 %v576, %v827
  %841 = vrot.lane.b32.xlu0 %v829, 95
  %v842 = vpop.permute.xlu0 %841
  %843 = vrot.lane.b32.xlu0 %v830, 95
  %v844 = vpop.permute.xlu0 %843
  %845 = vrot.lane.b32.xlu0 %v831, 95
  %v846 = vpop.permute.xlu0 %845
  %847 = vrot.lane.b32.xlu0 %v832, 95
  %v848 = vpop.permute.xlu0 %847
  %849 = vrot.lane.b32.xlu0 %v833, 95
  %v850 = vpop.permute.xlu0 %849
  %851 = vrot.lane.b32.xlu0 %v834, 95
  %v852 = vpop.permute.xlu0 %851
  %v853 = vsel %vm362, %v842, %v844
  %v854 = vsel %vm362, %v844, %v846
  %v855 = vsel %vm362, %v848, %v850
  %v856 = vsel %vm362, %v850, %v852
  %v861 = vmin.f32 %v820, %v853
  %v862 = vmin.f32 %v821, %v854
  %v863 = vmin.f32 %v822, %v855
  %v864 = vmin.f32 %v823, %v856
  %865 = vrot.lane.b32.xlu0 %v573, 94
  %v866 = vpop.permute.xlu0 %865
  %867 = vrot.lane.b32.xlu0 %v565, 94
  %v868 = vpop.permute.xlu0 %867
  %869 = vrot.lane.b32.xlu0 %v575, 94
  %v870 = vpop.permute.xlu0 %869
  %871 = vrot.lane.b32.xlu0 %v574, 94
  %v872 = vpop.permute.xlu0 %871
  %873 = vrot.lane.b32.xlu0 %v566, 94
  %v874 = vpop.permute.xlu0 %873
  %875 = vrot.lane.b32.xlu0 %v576, 94
  %v876 = vpop.permute.xlu0 %875
  %v877 = vsel %vm387, %v866, %v868
  %v878 = vsel %vm387, %v868, %v870
  %v879 = vsel %vm387, %v872, %v874
  %v880 = vsel %vm387, %v874, %v876
  %v885 = vsel %vm133, %v877, 0.0
  %v886 = vsel %vm134, %v878, 0.0
  %v887 = vsel %vm133, %v879, 0.0
  %v888 = vsel %vm134, %v880, 0.0
  %890 = vset.pattern.permute.xlu0 0
  %891 = vperm.xlu0 %890, %v40
  %v892 = vpop.permute.xlu0 %891
  %v894 = vsub.f32 %v885, %v892
  %v895 = vsub.f32 %v886, %v892
  %v896 = vsub.f32 %v887, %v892
  %v897 = vsub.f32 %v888, %v892
  %v898 = vmin.f32 %v861, %v894
  %v899 = vmin.f32 %v862, %v895
  %v900 = vmin.f32 %v863, %v896
  %v901 = vmin.f32 %v864, %v897
  %v902 = vsel %vm413, %v898, -inf
  %v903 = vrot.slane %v902, 4
  %v904 = vmax.f32 %v902, %v903
  %v905 = vrot.slane %v904, 2
  %v906 = vmax.f32 %v904, %v905
  %v907 = vrot.slane %v906, 1
  %v908 = vmax.f32 %v906, %v907
  %v909 = vsel %vm413, %v899, -inf
  %v910 = vrot.slane %v909, 4
  %v911 = vmax.f32 %v909, %v910
  %v912 = vrot.slane %v911, 2
  %v913 = vmax.f32 %v911, %v912
  %v914 = vrot.slane %v913, 1
  %v915 = vmax.f32 %v913, %v914
  %v916 = vsel %vm413, %v900, -inf
  %v917 = vrot.slane %v916, 4
  %v918 = vmax.f32 %v916, %v917
  %v919 = vrot.slane %v918, 2
  %v920 = vmax.f32 %v918, %v919
  %v921 = vrot.slane %v920, 1
  %v922 = vmax.f32 %v920, %v921
  %v923 = vsel %vm413, %v901, -inf
  %v924 = vrot.slane %v923, 4
  %v925 = vmax.f32 %v923, %v924
  %v926 = vrot.slane %v925, 2
  %v927 = vmax.f32 %v925, %v926
  %v928 = vrot.slane %v927, 1
  %v929 = vmax.f32 %v927, %v928
  %v930 = vsub.f32 %v898, %v908
  %v931 = vsub.f32 %v899, %v915
  %v932 = vsub.f32 %v900, %v922
  %v933 = vsub.f32 %v901, %v929
  %v934 = vmul.f32 %v930, 1.442695
  %v935 = vpow.pop %v934
  %v936 = vmul.f32 %v931, 1.442695
  %v937 = vpow.pop %v936
  %v938 = vmul.f32 %v932, 1.442695
  %v939 = vpow.pop %v938
  %v940 = vmul.f32 %v933, 1.442695
  %v941 = vpow.pop %v940
  %v942 = vsel %vm413, %v935, 0.0
  %v943 = vrot.slane %v942, 4
  %v944 = vadd.f32 %v942, %v943
  %v945 = vrot.slane %v944, 2
  %v946 = vadd.f32 %v944, %v945
  %v947 = vrot.slane %v946, 1
  %v948 = vadd.f32 %v946, %v947
  %v949 = vsel %vm413, %v937, 0.0
  %v950 = vrot.slane %v949, 4
  %v951 = vadd.f32 %v949, %v950
  %v952 = vrot.slane %v951, 2
  %v953 = vadd.f32 %v951, %v952
  %v954 = vrot.slane %v953, 1
  %v955 = vadd.f32 %v953, %v954
  %v956 = vsel %vm413, %v939, 0.0
  %v957 = vrot.slane %v956, 4
  %v958 = vadd.f32 %v956, %v957
  %v959 = vrot.slane %v958, 2
  %v960 = vadd.f32 %v958, %v959
  %v961 = vrot.slane %v960, 1
  %v962 = vadd.f32 %v960, %v961
  %v963 = vsel %vm413, %v941, 0.0
  %v964 = vrot.slane %v963, 4
  %v965 = vadd.f32 %v963, %v964
  %v966 = vrot.slane %v965, 2
  %v967 = vadd.f32 %v965, %v966
  %v968 = vrot.slane %v967, 1
  %v969 = vadd.f32 %v967, %v968
  %v970 = vrcp.pop %v948
  %v971 = vmul.f32 1.0, %v970
  %v972 = vrcp.pop %v955
  %v973 = vmul.f32 1.0, %v972
  %v974 = vrcp.pop %v962
  %v975 = vmul.f32 1.0, %v974
  %v976 = vrcp.pop %v969
  %v977 = vmul.f32 1.0, %v976
  %v978 = vmul.f32 %v935, %v971
  %v979 = vmul.f32 %v937, %v973
  %v980 = vmul.f32 %v939, %v975
  %v981 = vmul.f32 %v941, %v977
  %v982 = vsel %vm413, %v978, 0.0
  %v983 = vsel %vm413, %v979, 0.0
  %v984 = vadd.f32 %v982, %v983
  %985 = vadd.xlane.f32.xlu0 %v984
  %v986 = vpop.xlane.xlu0 %985
  %v987 = vsel %vm413, %v980, 0.0
  %v988 = vsel %vm413, %v981, 0.0
  %v989 = vadd.f32 %v987, %v988
  %990 = vadd.xlane.f32.xlu0 %v989
  %v991 = vpop.xlane.xlu0 %990
  %v992 = vsel %vm413, %v986, 0.0
  %v993 = vsel %vm413, %v991, 0.0
  %v994 = vadd.f32 %v992, %v993
  %v995 = vmul.f32 %v994, 0.001953125
  %v996 = vsub.f32 %v978, %v995
  %v997 = vsub.f32 %v979, %v995
  %v998 = vsub.f32 %v980, %v995
  %v999 = vsub.f32 %v981, %v995
  %v1000 = vmul.f32 %v996, %v996
  %v1001 = vmul.f32 %v997, %v997
  %v1002 = vmul.f32 %v998, %v998
  %v1003 = vmul.f32 %v999, %v999
  %v1004 = vsel %vm413, %v1000, 0.0
  %v1005 = vsel %vm413, %v1001, 0.0
  %v1006 = vadd.f32 %v1004, %v1005
  %1007 = vadd.xlane.f32.xlu0 %v1006
  %v1008 = vpop.xlane.xlu0 %1007
  %v1009 = vsel %vm413, %v1002, 0.0
  %v1010 = vsel %vm413, %v1003, 0.0
  %v1011 = vadd.f32 %v1009, %v1010
  %1012 = vadd.xlane.f32.xlu0 %v1011
  %v1013 = vpop.xlane.xlu0 %1012
  %v1014 = vsel %vm413, %v1008, 0.0
  %v1015 = vsel %vm413, %v1013, 0.0
  %v1016 = vadd.f32 %v1014, %v1015
  %v1017 = vmul.f32 %v1016, 0.001953125
  %v1018 = vadd.f32 %v1017, 1e-05
  %v1019 = vrsqrt.pop %v1018
  %v1020 = vmul.f32 %v43, %v1019
  %v1021 = vmul.f32 %v995, %v1020
  %v1022 = vsub.f32 %v44, %v1021
  %1024 = vset.pattern.permute.xlu0 0
  %1025 = vperm.xlu0 %1024, %v1020
  %v1026 = vpop.permute.xlu0 %1025
  %v1028 = vmul.f32 %v978, %v1026
  %v1029 = vmul.f32 %v979, %v1026
  %v1030 = vmul.f32 %v980, %v1026
  %v1031 = vmul.f32 %v981, %v1026
  %1033 = vset.pattern.permute.xlu0 0
  %1034 = vperm.xlu0 %1033, %v1022
  %v1035 = vpop.permute.xlu0 %1034
  %v1037 = vadd.f32 %v1028, %v1035
  %v1038 = vadd.f32 %v1029, %v1035
  %v1039 = vadd.f32 %v1030, %v1035
  %v1040 = vadd.f32 %v1031, %v1035
  %v1041 = vmax.f32 %v1037, 0.0
  %v1042 = vmax.f32 %v1038, 0.0
  %v1043 = vmax.f32 %v1039, 0.0
  %v1044 = vmax.f32 %v1040, 0.0
  %v1049 = vcombine.low %v1041, %v1042
  %v1050 = vcombine.low %v1043, %v1044
  %1053 = vst [vmem:[%s3] sm:$0xff] %v1049
  %1054 = vst [vmem:[%s3 + $0x8] sm:$0xff] %v1050
  // Predicated region
  $region14: #{closing_forward.1} parent=0 // pred_check
    _
  $region15: #{closing_forward.1} parent=0 // pred_check_branch
    %1056 = sbr.rel (0) target = $region17
  $region16: #{closing_forward.1} parent=0 // pred_region
    _
  $region17: #{closing_forward.1} parent=0 // pred_fallthru
    _
  // Predicated region
  $region18: #{closing_forward.1} parent=0 // pred_check
    _
  $region19: #{closing_forward.1} parent=0 // pred_check_branch
    %1058 = sbr.rel (0) target = $region21
  $region20: #{closing_forward.1} parent=0 // pred_region
    _
  $region21: #{closing_forward.1} parent=0 // pred_fallthru
    _

</llo_original>
